<compile_context>
chip_gen: v7x
topology: tpu7x:2x2x1
jax: 0.10.0
libtpu: 0.0.40
codegen_flags: <defaults>
</compile_context>

<pallas_src>
import functools

import jax
import jax.numpy as jnp
from jax.experimental import pallas as pl
from jax.experimental.pallas import tpu as pltpu

EPS = 1e-7


def _round_up(x, m):
    return (x + m - 1) // m * m


def _window_and_basis(n_fft):
    n_freq = n_fft // 2 + 1
    n = jnp.arange(n_fft, dtype=jnp.float32)
    # torch.hann_window default is periodic; torchaudio Spectrogram(normalized=True)
    # divides by sqrt(sum(window^2)).
    w = 0.5 * (1.0 - jnp.cos(2.0 * jnp.pi * n / n_fft))
    w = w / jnp.sqrt(jnp.sum(w * w))
    k = jnp.arange(n_freq, dtype=jnp.float32)
    ang = 2.0 * jnp.pi * n[:, None] * k[None, :] / n_fft          # (n_fft, n_freq)
    return w, jnp.cos(ang), -jnp.sin(ang)


def _sss_kernel(xt_ref, xp_ref, basis_ref,
                diff_ref, summ_ref, logd_ref,
                diff_acc, summ_acc, logd_acc,
                *, T, TILE_T, tiles_per_split, FP, needs_mask):
    # Blocks per grid step (b, split, kt):
    #   xt_ref / xp_ref : (1, TILE_T, n_fft)   raw (unwindowed) frames
    #   basis_ref       : (n_fft, 2*FP)        window-folded [cos | -sin] basis
    # Outputs (one scalar per (batch, split), written at the last kt):
    #   diff_ref : sum((S_t - S_p)^2)          block (1,1,1,1)
    #   summ_ref : sum((S_t + S_p)^2)
    #   logd_ref : sum(|log10 S_t - log10 S_p|), clamp at EPS
    # Scratch: (1, FP) f32 per-lane partial accumulators (reduced once at end).
    kt = pl.program_id(2)

    @pl.when(kt == 0)
    def _():
        diff_acc[...] = jnp.zeros_like(diff_acc)
        summ_acc[...] = jnp.zeros_like(summ_acc)
        logd_acc[...] = jnp.zeros_like(logd_acc)

    xt = xt_ref[0]                                                # (TILE_T, n_fft)
    xp = xp_ref[0]

    if needs_mask:
        # Zero out frame rows past the real frame count T (covers both the
        # ragged last tile and fully out-of-range logical tiles that were
        # clamped in the index_map).  Zero frames -> |S| = 0 for both signals
        # -> exactly 0 contribution to every accumulated term.
        base = (pl.program_id(1) * tiles_per_split + kt) * TILE_T
        rows = jax.lax.broadcasted_iota(jnp.int32, xt.shape, 0) + base
        valid = rows < T
        zero = jnp.zeros_like(xt)
        xt = jnp.where(valid, xt, zero)
        xp = jnp.where(valid, xp, zero)

    # Two separate MXU dots (no concat copy); RHS stays resident either way.
    s_t = jnp.dot(xt, basis_ref[...], preferred_element_type=jnp.float32)
    s_p = jnp.dot(xp, basis_ref[...], preferred_element_type=jnp.float32)

    mag_t = jnp.sqrt(s_t[:, :FP] * s_t[:, :FP] + s_t[:, FP:] * s_t[:, FP:])
    mag_p = jnp.sqrt(s_p[:, :FP] * s_p[:, :FP] + s_p[:, FP:] * s_p[:, FP:])
    log_t = jnp.log10(jnp.maximum(mag_t, EPS))
    log_p = jnp.log10(jnp.maximum(mag_p, EPS))

    d = mag_t - mag_p
    sm = mag_t + mag_p
    # Per-step: only sublane-axis reductions into per-lane partial accumulators.
    diff_acc[...] += jnp.sum(d * d, axis=0, keepdims=True)
    summ_acc[...] += jnp.sum(sm * sm, axis=0, keepdims=True)
    logd_acc[...] += jnp.sum(jnp.abs(log_t - log_p), axis=0, keepdims=True)

    @pl.when(kt == pl.num_programs(2) - 1)
    def _():
        # One cross-lane reduction + scalar store per (batch, split).
        diff_ref[0, 0] = jnp.sum(diff_acc[...], keepdims=True)
        summ_ref[0, 0] = jnp.sum(summ_acc[...], keepdims=True)
        logd_ref[0, 0] = jnp.sum(logd_acc[...], keepdims=True)


def sss_loss_pallas(x_true, x_pred, n_fft: int = 111, overlap: int = 0,
                    max_tile_t: int = 2048):
    # Mirrors SSSLoss.forward with use_mel=False.
    if x_true.ndim == 3:
        x_true = jnp.squeeze(x_true, axis=-2)
    if x_pred.ndim == 3:
        x_pred = jnp.squeeze(x_pred, axis=-2)

    hop = int(n_fft * (1 - overlap))
    assert hop == n_fft, "overlap=0 assumed (framing is a pure reshape)"

    B, L = x_true.shape
    T = (L - n_fft) // hop + 1                   # center=False frame count
    n_freq = n_fft // 2 + 1
    Lc = T * n_fft

    # Keep bf16 if the caller already supplies bf16 (halves the dominant HBM
    # read; bf16 MXU on v6e/v7x).  Default stays f32: the log10-L1 term is
    # clamp-at-EPS sensitive, validate before switching precision.
    if x_true.dtype == jnp.bfloat16 and x_pred.dtype == jnp.bfloat16:
        frame_dtype = jnp.bfloat16
    else:
        frame_dtype = jnp.float32

    # Free row-major reshape — no padded frame copy is materialized in HBM.
    # (If L > T*n_fft the slice costs one waveform-sized copy; typically L == Lc.)
    frames_t = x_true[:, :Lc].reshape(B, T, n_fft).astype(frame_dtype)
    frames_p = x_pred[:, :Lc].reshape(B, T, n_fft).astype(frame_dtype)

    # Frame tiling.  Single tile uses the full (possibly unaligned) T; multi
    # tile uses an 8-aligned TILE_T < T and masks the ragged tail in-kernel.
    if T <= max_tile_t:
        TILE_T = T
        n_tiles = 1
    else:
        n_tiles = pl.cdiv(T, max_tile_t)
        TILE_T = _round_up(pl.cdiv(T, n_tiles), 8)
        n_tiles = pl.cdiv(T, TILE_T)

    NSPLIT = 2 if n_tiles >= 2 else 1            # v7x: feed the 2nd TensorCore
    tiles_per_split = pl.cdiv(n_tiles, NSPLIT)
    needs_mask = (NSPLIT * tiles_per_split * TILE_T != T)

    # Window-folded one-sided DFT basis, freq padded 56 -> 64 so re|im fill
    # 128 output lanes.  Contraction dim stays at the true n_fft = 111.
    FP = _round_up(n_freq, 64)
    w, cosm, sinm = _window_and_basis(n_fft)
    basis = jnp.concatenate(
        [jnp.pad(w[:, None] * cosm, ((0, 0), (0, FP - n_freq))),
         jnp.pad(w[:, None] * sinm, ((0, 0), (0, FP - n_freq)))],
        axis=1).astype(frame_dtype)              # (n_fft, 2*FP) = (111, 128)

    def x_index_map(b, s, kt):
        t = s * tiles_per_split + kt
        # Clamp so fully out-of-range logical tiles never issue an OOB DMA;
        # their contribution is zeroed by the in-kernel row mask.
        return (b, jnp.minimum(t, n_tiles - 1), 0)

    kernel = functools.partial(
        _sss_kernel, T=T, TILE_T=TILE_T, tiles_per_split=tiles_per_split,
        FP=FP, needs_mask=needs_mask)

    out_shape = [jax.ShapeDtypeStruct((B, NSPLIT, 1, 1), jnp.float32)
                 for _ in range(3)]

    total_tiles = B * NSPLIT * tiles_per_split
    flops = 2 * 2 * total_tiles * TILE_T * n_fft * (2 * FP)      # two dots, FMA=2
    transcendentals = 2 * 2 * total_tiles * TILE_T * FP          # sqrt + log10, 2 signals
    bytes_accessed = (2 * B * T * n_fft * frames_t.dtype.itemsize
                      + n_fft * 2 * FP * basis.dtype.itemsize
                      + 3 * B * NSPLIT * 4)

    diff_sq, sum_sq, log_abs = pl.pallas_call(
        kernel,
        out_shape=out_shape,
        grid_spec=pltpu.PrefetchScalarGridSpec(
            num_scalar_prefetch=0,
            grid=(B, NSPLIT, tiles_per_split),
            in_specs=[
                pl.BlockSpec((1, TILE_T, n_fft), x_index_map),
                pl.BlockSpec((1, TILE_T, n_fft), x_index_map),
                pl.BlockSpec((n_fft, 2 * FP), lambda b, s, kt: (0, 0)),
            ],
            out_specs=[
                pl.BlockSpec((1, 1, 1, 1), lambda b, s, kt: (b, s, 0, 0)),
                pl.BlockSpec((1, 1, 1, 1), lambda b, s, kt: (b, s, 0, 0)),
                pl.BlockSpec((1, 1, 1, 1), lambda b, s, kt: (b, s, 0, 0)),
            ],
            scratch_shapes=[pltpu.VMEM((1, FP), jnp.float32)] * 3,
        ),
        compiler_params=pltpu.CompilerParams(
            dimension_semantics=("parallel", "parallel", "arbitrary"),
            vmem_limit_bytes=32 * 1024 * 1024),   # v5e default is only 16 MiB
        cost_estimate=pl.CostEstimate(flops=flops,
                                      transcendentals=transcendentals,
                                      bytes_accessed=bytes_accessed),
    )(frames_t, frames_p, basis)

    diff_sq = jnp.sum(diff_sq, axis=(1, 2, 3))   # (B,) — fold the split axis
    sum_sq = jnp.sum(sum_sq, axis=(1, 2, 3))
    log_abs = jnp.sum(log_abs)

    # converge_term: mean_b ||S_t - S_p||_F / ||S_t + S_p||_F
    converge_term = jnp.mean(jnp.sqrt(diff_sq) / jnp.sqrt(sum_sq))
    # log_term: L1 (mean abs diff) over the B * n_freq * T spectrogram elements
    log_term = log_abs / (B * n_freq * T)
    return converge_term + log_term


def _sss_loss_ref(x_true, x_pred, n_fft: int = 111):
    # Pure-JAX reference (unpadded math) for validation.
    if x_true.ndim == 3:
        x_true = jnp.squeeze(x_true, axis=-2)
    if x_pred.ndim == 3:
        x_pred = jnp.squeeze(x_pred, axis=-2)
    B, L = x_true.shape
    T = (L - n_fft) // n_fft + 1
    w, cosm, sinm = _window_and_basis(n_fft)
    hp = jax.lax.Precision.HIGHEST

    def spec(x):
        fr = x[:, :T * n_fft].reshape(B, T, n_fft).astype(jnp.float32) * w
        re = jnp.einsum('btn,nf->btf', fr, cosm, precision=hp)
        im = jnp.einsum('btn,nf->btf', fr, sinm, precision=hp)
        return jnp.sqrt(re * re + im * im)

    S_t, S_p = spec(x_true), spec(x_pred)
    converge = jnp.mean(
        jnp.sqrt(jnp.sum((S_t - S_p) ** 2, axis=(1, 2))) /
        jnp.sqrt(jnp.sum((S_t + S_p) ** 2, axis=(1, 2))))
    log_term = jnp.mean(jnp.abs(jnp.log10(jnp.maximum(S_t, EPS)) -
                                jnp.log10(jnp.maximum(S_p, EPS))))
    return converge + log_term


if __name__ == "__main__":
    key = jax.random.PRNGKey(0)
    B, n_fft, T = 2, 111, 37
    L = n_fft * T                        # 4107 samples -> 37 frames (hop = n_fft)
    k1, k2 = jax.random.split(key)
    x_true = jax.random.normal(k1, (B, 1, L), dtype=jnp.float32)
    x_pred = x_true + 0.1 * jax.random.normal(k2, (B, 1, L), dtype=jnp.float32)

    ref = jax.block_until_ready(_sss_loss_ref(x_true, x_pred))

    # 1) default path: single full-T frame tile
    loss_a = jax.block_until_ready(sss_loss_pallas(x_true, x_pred))
    # 2) small tiles: exercises the multi-tile reduction, the 2-way parallel
    #    frame-axis split (v7x), index clamping and ragged-tail masking.
    loss_b = jax.block_until_ready(sss_loss_pallas(x_true, x_pred, max_tile_t=16))

    for loss in (loss_a, loss_b):
        assert bool(jnp.isfinite(loss))
        assert abs(float(loss) - float(ref)) < 5e-3 * max(1.0, abs(float(ref)))
    print("KERNEL_OK")
</pallas_src>

<mosaic_0001>
module attributes {stable_mosaic.version = 11 : i64} {
  func.func @_sss_kernel(%arg0: i32, %arg1: i32, %arg2: i32, %arg3: memref<1x37x111xf32, #tpu.memory_space<vmem>>, %arg4: memref<1x37x111xf32, #tpu.memory_space<vmem>>, %arg5: memref<111x128xf32, #tpu.memory_space<vmem>>, %arg6: memref<1x1x1x1xf32, #tpu.memory_space<vmem>>, %arg7: memref<1x1x1x1xf32, #tpu.memory_space<vmem>>, %arg8: memref<1x1x1x1xf32, #tpu.memory_space<vmem>>, %arg9: memref<1x64xf32, #tpu.memory_space<vmem>>, %arg10: memref<1x64xf32, #tpu.memory_space<vmem>>, %arg11: memref<1x64xf32, #tpu.memory_space<vmem>>) attributes {dimension_semantics = [#tpu.dimension_semantics<parallel>, #tpu.dimension_semantics<parallel>, #tpu.dimension_semantics<arbitrary>], iteration_bounds = array<i64: 2, 1, 1>, scalar_prefetch = 0 : i64, scratch_operands = 3 : i64, tpu.core_type = #tpu.core_type<tc>, window_params = [{transform_indices = @transform_0, window_bounds = array<i64: 1, 37, 111>}, {transform_indices = @transform_1, window_bounds = array<i64: 1, 37, 111>}, {pipeline_mode = #tpu.pipeline_mode<synchronous>, transform_indices = @transform_2, window_bounds = array<i64: 111, 128>}, {transform_indices = @transform_3, window_bounds = array<i64: 1, 1, 1, 1>}, {transform_indices = @transform_4, window_bounds = array<i64: 1, 1, 1, 1>}, {transform_indices = @transform_5, window_bounds = array<i64: 1, 1, 1, 1>}]} {
    %c0_i32 = arith.constant 0 : i32
    %0 = arith.cmpi eq, %arg2, %c0_i32 : i32
    %1 = arith.extui %0 : i1 to i32
    %c0_i32_0 = arith.constant 0 : i32
    %2 = arith.cmpi ne, %1, %c0_i32_0 : i32
    scf.if %2 {
      %cst_32 = arith.constant 0.000000e+00 : f32
      %61 = vector.broadcast %cst_32 : f32 to vector<1x64xf32>
      %c0_33 = arith.constant 0 : index
      %c0_34 = arith.constant 0 : index
      %62 = vector.load %arg9[%c0_33, %c0_34] : memref<1x64xf32, #tpu.memory_space<vmem>>, vector<1x64xf32>
      tpu.vector_store %arg9[%c0_33, %c0_34], %61 {strides = array<i32>} : memref<1x64xf32, #tpu.memory_space<vmem>>, vector<1x64xf32>,
      %cst_35 = arith.constant 0.000000e+00 : f32
      %63 = vector.broadcast %cst_35 : f32 to vector<1x64xf32>
      %c0_36 = arith.constant 0 : index
      %c0_37 = arith.constant 0 : index
      %64 = vector.load %arg10[%c0_36, %c0_37] : memref<1x64xf32, #tpu.memory_space<vmem>>, vector<1x64xf32>
      tpu.vector_store %arg10[%c0_36, %c0_37], %63 {strides = array<i32>} : memref<1x64xf32, #tpu.memory_space<vmem>>, vector<1x64xf32>,
      %cst_38 = arith.constant 0.000000e+00 : f32
      %65 = vector.broadcast %cst_38 : f32 to vector<1x64xf32>
      %c0_39 = arith.constant 0 : index
      %c0_40 = arith.constant 0 : index
      %66 = vector.load %arg11[%c0_39, %c0_40] : memref<1x64xf32, #tpu.memory_space<vmem>>, vector<1x64xf32>
      tpu.vector_store %arg11[%c0_39, %c0_40], %65 {strides = array<i32>} : memref<1x64xf32, #tpu.memory_space<vmem>>, vector<1x64xf32>,
    } else {
    }
    %c0 = arith.constant 0 : index
    %c0_1 = arith.constant 0 : index
    %c0_2 = arith.constant 0 : index
    %3 = vector.load %arg3[%c0, %c0_1, %c0_2] : memref<1x37x111xf32, #tpu.memory_space<vmem>>, vector<1x37x111xf32>
    %4 = vector.shape_cast %3 : vector<1x37x111xf32> to vector<37x111xf32>
    %c0_3 = arith.constant 0 : index
    %c0_4 = arith.constant 0 : index
    %c0_5 = arith.constant 0 : index
    %5 = vector.load %arg4[%c0_3, %c0_4, %c0_5] : memref<1x37x111xf32, #tpu.memory_space<vmem>>, vector<1x37x111xf32>
    %6 = vector.shape_cast %5 : vector<1x37x111xf32> to vector<37x111xf32>
    %c0_6 = arith.constant 0 : index
    %c0_7 = arith.constant 0 : index
    %7 = vector.load %arg5[%c0_6, %c0_7] : memref<111x128xf32, #tpu.memory_space<vmem>>, vector<111x128xf32>
    %cst = arith.constant dense<0.000000e+00> : vector<37x128xf32>
    %8 = tpu.matmul %4, %7, %cst {dimension_numbers = #tpu.dot_dimension_numbers<[1], [0], [0], [1], [0, 0, 1, 1], [], []>} : vector<37x111xf32>, vector<111x128xf32>, vector<37x128xf32> -> vector<37x128xf32>
    %c0_8 = arith.constant 0 : index
    %c0_9 = arith.constant 0 : index
    %9 = vector.load %arg5[%c0_8, %c0_9] : memref<111x128xf32, #tpu.memory_space<vmem>>, vector<111x128xf32>
    %cst_10 = arith.constant dense<0.000000e+00> : vector<37x128xf32>
    %10 = tpu.matmul %6, %9, %cst_10 {dimension_numbers = #tpu.dot_dimension_numbers<[1], [0], [0], [1], [0, 0, 1, 1], [], []>} : vector<37x111xf32>, vector<111x128xf32>, vector<37x128xf32> -> vector<37x128xf32>
    %11 = vector.extract_strided_slice %8 {offsets = [0, 0], sizes = [37, 64], strides = [1, 1]} : vector<37x128xf32> to vector<37x64xf32>
    %12 = vector.extract_strided_slice %8 {offsets = [0, 0], sizes = [37, 64], strides = [1, 1]} : vector<37x128xf32> to vector<37x64xf32>
    %13 = arith.mulf %11, %12 : vector<37x64xf32>
    %14 = vector.extract_strided_slice %8 {offsets = [0, 64], sizes = [37, 64], strides = [1, 1]} : vector<37x128xf32> to vector<37x64xf32>
    %15 = vector.extract_strided_slice %8 {offsets = [0, 64], sizes = [37, 64], strides = [1, 1]} : vector<37x128xf32> to vector<37x64xf32>
    %16 = arith.mulf %14, %15 : vector<37x64xf32>
    %17 = arith.addf %13, %16 : vector<37x64xf32>
    %18 = math.sqrt %17 : vector<37x64xf32>
    %19 = vector.extract_strided_slice %10 {offsets = [0, 0], sizes = [37, 64], strides = [1, 1]} : vector<37x128xf32> to vector<37x64xf32>
    %20 = vector.extract_strided_slice %10 {offsets = [0, 0], sizes = [37, 64], strides = [1, 1]} : vector<37x128xf32> to vector<37x64xf32>
    %21 = arith.mulf %19, %20 : vector<37x64xf32>
    %22 = vector.extract_strided_slice %10 {offsets = [0, 64], sizes = [37, 64], strides = [1, 1]} : vector<37x128xf32> to vector<37x64xf32>
    %23 = vector.extract_strided_slice %10 {offsets = [0, 64], sizes = [37, 64], strides = [1, 1]} : vector<37x128xf32> to vector<37x64xf32>
    %24 = arith.mulf %22, %23 : vector<37x64xf32>
    %25 = arith.addf %21, %24 : vector<37x64xf32>
    %26 = math.sqrt %25 : vector<37x64xf32>
    %cst_11 = arith.constant 1.000000e-07 : f32
    %27 = vector.broadcast %cst_11 : f32 to vector<37x64xf32>
    %28 = arith.maximumf %18, %27 : vector<37x64xf32>
    %29 = math.log %28 : vector<37x64xf32>
    %cst_12 = arith.constant 0.434294492 : f32
    %30 = vector.broadcast %cst_12 : f32 to vector<37x64xf32>
    %31 = arith.mulf %29, %30 : vector<37x64xf32>
    %cst_13 = arith.constant 1.000000e-07 : f32
    %32 = vector.broadcast %cst_13 : f32 to vector<37x64xf32>
    %33 = arith.maximumf %26, %32 : vector<37x64xf32>
    %34 = math.log %33 : vector<37x64xf32>
    %cst_14 = arith.constant 0.434294492 : f32
    %35 = vector.broadcast %cst_14 : f32 to vector<37x64xf32>
    %36 = arith.mulf %34, %35 : vector<37x64xf32>
    %37 = arith.subf %18, %26 : vector<37x64xf32>
    %38 = arith.addf %18, %26 : vector<37x64xf32>
    %c0_15 = arith.constant 0 : index
    %c0_16 = arith.constant 0 : index
    %39 = vector.load %arg9[%c0_15, %c0_16] : memref<1x64xf32, #tpu.memory_space<vmem>>, vector<1x64xf32>
    %40 = arith.mulf %37, %37 : vector<37x64xf32>
    %cst_17 = arith.constant dense<0.000000e+00> : vector<64xf32>
    %41 = vector.multi_reduction <add>, %40, %cst_17 [0] : vector<37x64xf32> to vector<64xf32>
    %42 = vector.shape_cast %41 : vector<64xf32> to vector<1x64xf32>
    %43 = arith.addf %39, %42 : vector<1x64xf32>
    %c0_18 = arith.constant 0 : index
    %c0_19 = arith.constant 0 : index
    %44 = vector.load %arg9[%c0_18, %c0_19] : memref<1x64xf32, #tpu.memory_space<vmem>>, vector<1x64xf32>
    tpu.vector_store %arg9[%c0_18, %c0_19], %43 {strides = array<i32>} : memref<1x64xf32, #tpu.memory_space<vmem>>, vector<1x64xf32>,
    %c0_20 = arith.constant 0 : index
    %c0_21 = arith.constant 0 : index
    %45 = vector.load %arg10[%c0_20, %c0_21] : memref<1x64xf32, #tpu.memory_space<vmem>>, vector<1x64xf32>
    %46 = arith.mulf %38, %38 : vector<37x64xf32>
    %cst_22 = arith.constant dense<0.000000e+00> : vector<64xf32>
    %47 = vector.multi_reduction <add>, %46, %cst_22 [0] : vector<37x64xf32> to vector<64xf32>
    %48 = vector.shape_cast %47 : vector<64xf32> to vector<1x64xf32>
    %49 = arith.addf %45, %48 : vector<1x64xf32>
    %c0_23 = arith.constant 0 : index
    %c0_24 = arith.constant 0 : index
    %50 = vector.load %arg10[%c0_23, %c0_24] : memref<1x64xf32, #tpu.memory_space<vmem>>, vector<1x64xf32>
    tpu.vector_store %arg10[%c0_23, %c0_24], %49 {strides = array<i32>} : memref<1x64xf32, #tpu.memory_space<vmem>>, vector<1x64xf32>,
    %c0_25 = arith.constant 0 : index
    %c0_26 = arith.constant 0 : index
    %51 = vector.load %arg11[%c0_25, %c0_26] : memref<1x64xf32, #tpu.memory_space<vmem>>, vector<1x64xf32>
    %52 = arith.subf %31, %36 : vector<37x64xf32>
    %53 = math.absf %52 : vector<37x64xf32>
    %cst_27 = arith.constant dense<0.000000e+00> : vector<64xf32>
    %54 = vector.multi_reduction <add>, %53, %cst_27 [0] : vector<37x64xf32> to vector<64xf32>
    %55 = vector.shape_cast %54 : vector<64xf32> to vector<1x64xf32>
    %56 = arith.addf %51, %55 : vector<1x64xf32>
    %c0_28 = arith.constant 0 : index
    %c0_29 = arith.constant 0 : index
    %57 = vector.load %arg11[%c0_28, %c0_29] : memref<1x64xf32, #tpu.memory_space<vmem>>, vector<1x64xf32>
    tpu.vector_store %arg11[%c0_28, %c0_29], %56 {strides = array<i32>} : memref<1x64xf32, #tpu.memory_space<vmem>>, vector<1x64xf32>,
    %c0_i32_30 = arith.constant 0 : i32
    %58 = arith.cmpi eq, %arg2, %c0_i32_30 : i32
    %59 = arith.extui %58 : i1 to i32
    %c0_i32_31 = arith.constant 0 : i32
    %60 = arith.cmpi ne, %59, %c0_i32_31 : i32
    scf.if %60 {
      %c0_32 = arith.constant 0 : index
      %c0_33 = arith.constant 0 : index
      %61 = vector.load %arg9[%c0_32, %c0_33] : memref<1x64xf32, #tpu.memory_space<vmem>>, vector<1x64xf32>
      %62 = vector.shape_cast %61 : vector<1x64xf32> to vector<1x1x64xf32>
      %cst_34 = arith.constant dense<0.000000e+00> : vector<1xf32>
      %63 = vector.multi_reduction <add>, %62, %cst_34 [1, 2] : vector<1x1x64xf32> to vector<1xf32>
      %64 = vector.shape_cast %63 : vector<1xf32> to vector<1x1x1xf32>
      %65 = vector.extract %64[0, 0, 0] : f32 from vector<1x1x1xf32>
      %66 = vector.broadcast %65 : f32 to vector<1x1xf32>
      %c0_35 = arith.constant 0 : index
      %c0_36 = arith.constant 0 : index
      %c0_37 = arith.constant 0 : index
      %c0_38 = arith.constant 0 : index
      %67 = vector.load %arg6[%c0_35, %c0_36, %c0_37, %c0_38] : memref<1x1x1x1xf32, #tpu.memory_space<vmem>>, vector<1x1x1x1xf32>
      %68 = vector.shape_cast %67 : vector<1x1x1x1xf32> to vector<1x1xf32>
      %69 = vector.shape_cast %66 : vector<1x1xf32> to vector<1x1x1x1xf32>
      tpu.vector_store %arg6[%c0_35, %c0_36, %c0_37, %c0_38], %69 {strides = array<i32>} : memref<1x1x1x1xf32, #tpu.memory_space<vmem>>, vector<1x1x1x1xf32>,
      %c0_39 = arith.constant 0 : index
      %c0_40 = arith.constant 0 : index
      %70 = vector.load %arg10[%c0_39, %c0_40] : memref<1x64xf32, #tpu.memory_space<vmem>>, vector<1x64xf32>
      %71 = vector.shape_cast %70 : vector<1x64xf32> to vector<1x1x64xf32>
      %cst_41 = arith.constant dense<0.000000e+00> : vector<1xf32>
      %72 = vector.multi_reduction <add>, %71, %cst_41 [1, 2] : vector<1x1x64xf32> to vector<1xf32>
      %73 = vector.shape_cast %72 : vector<1xf32> to vector<1x1x1xf32>
      %74 = vector.extract %73[0, 0, 0] : f32 from vector<1x1x1xf32>
      %75 = vector.broadcast %74 : f32 to vector<1x1xf32>
      %c0_42 = arith.constant 0 : index
      %c0_43 = arith.constant 0 : index
      %c0_44 = arith.constant 0 : index
      %c0_45 = arith.constant 0 : index
      %76 = vector.load %arg7[%c0_42, %c0_43, %c0_44, %c0_45] : memref<1x1x1x1xf32, #tpu.memory_space<vmem>>, vector<1x1x1x1xf32>
      %77 = vector.shape_cast %76 : vector<1x1x1x1xf32> to vector<1x1xf32>
      %78 = vector.shape_cast %75 : vector<1x1xf32> to vector<1x1x1x1xf32>
      tpu.vector_store %arg7[%c0_42, %c0_43, %c0_44, %c0_45], %78 {strides = array<i32>} : memref<1x1x1x1xf32, #tpu.memory_space<vmem>>, vector<1x1x1x1xf32>,
      %c0_46 = arith.constant 0 : index
      %c0_47 = arith.constant 0 : index
      %79 = vector.load %arg11[%c0_46, %c0_47] : memref<1x64xf32, #tpu.memory_space<vmem>>, vector<1x64xf32>
      %80 = vector.shape_cast %79 : vector<1x64xf32> to vector<1x1x64xf32>
      %cst_48 = arith.constant dense<0.000000e+00> : vector<1xf32>
      %81 = vector.multi_reduction <add>, %80, %cst_48 [1, 2] : vector<1x1x64xf32> to vector<1xf32>
      %82 = vector.shape_cast %81 : vector<1xf32> to vector<1x1x1xf32>
      %83 = vector.extract %82[0, 0, 0] : f32 from vector<1x1x1xf32>
      %84 = vector.broadcast %83 : f32 to vector<1x1xf32>
      %c0_49 = arith.constant 0 : index
      %c0_50 = arith.constant 0 : index
      %c0_51 = arith.constant 0 : index
      %c0_52 = arith.constant 0 : index
      %85 = vector.load %arg8[%c0_49, %c0_50, %c0_51, %c0_52] : memref<1x1x1x1xf32, #tpu.memory_space<vmem>>, vector<1x1x1x1xf32>
      %86 = vector.shape_cast %85 : vector<1x1x1x1xf32> to vector<1x1xf32>
      %87 = vector.shape_cast %84 : vector<1x1xf32> to vector<1x1x1x1xf32>
      tpu.vector_store %arg8[%c0_49, %c0_50, %c0_51, %c0_52], %87 {strides = array<i32>} : memref<1x1x1x1xf32, #tpu.memory_space<vmem>>, vector<1x1x1x1xf32>,
    } else {
    }
    return
  }
  func.func @transform_0(%arg0: i32, %arg1: i32, %arg2: i32) -> (i32, i32, i32) {
    %c1_i32 = arith.constant 1 : i32
    %0 = arith.muli %arg1, %c1_i32 : i32
    %1 = arith.addi %0, %arg2 : i32
    %c0_i32 = arith.constant 0 : i32
    %2 = arith.minsi %1, %c0_i32 : i32
    %c0_i32_0 = arith.constant 0 : i32
    %c0_i32_1 = arith.constant 0 : i32
    return %arg0, %2, %c0_i32_0 : i32, i32, i32
  }
  func.func @transform_1(%arg0: i32, %arg1: i32, %arg2: i32) -> (i32, i32, i32) {
    %c1_i32 = arith.constant 1 : i32
    %0 = arith.muli %arg1, %c1_i32 : i32
    %1 = arith.addi %0, %arg2 : i32
    %c0_i32 = arith.constant 0 : i32
    %2 = arith.minsi %1, %c0_i32 : i32
    %c0_i32_0 = arith.constant 0 : i32
    %c0_i32_1 = arith.constant 0 : i32
    return %arg0, %2, %c0_i32_0 : i32, i32, i32
  }
  func.func @transform_2(%arg0: i32, %arg1: i32, %arg2: i32) -> (i32, i32) {
    %c0_i32 = arith.constant 0 : i32
    %c0_i32_0 = arith.constant 0 : i32
    %c0_i32_1 = arith.constant 0 : i32
    return %c0_i32, %c0_i32_0 : i32, i32
  }
  func.func @transform_3(%arg0: i32, %arg1: i32, %arg2: i32) -> (i32, i32, i32, i32) {
    %c0_i32 = arith.constant 0 : i32
    %c0_i32_0 = arith.constant 0 : i32
    %c0_i32_1 = arith.constant 0 : i32
    return %arg0, %arg1, %c0_i32, %c0_i32_0 : i32, i32, i32, i32
  }
  func.func @transform_4(%arg0: i32, %arg1: i32, %arg2: i32) -> (i32, i32, i32, i32) {
    %c0_i32 = arith.constant 0 : i32
    %c0_i32_0 = arith.constant 0 : i32
    %c0_i32_1 = arith.constant 0 : i32
    return %arg0, %arg1, %c0_i32, %c0_i32_0 : i32, i32, i32, i32
  }
  func.func @transform_5(%arg0: i32, %arg1: i32, %arg2: i32) -> (i32, i32, i32, i32) {
    %c0_i32 = arith.constant 0 : i32
    %c0_i32_0 = arith.constant 0 : i32
    %c0_i32_1 = arith.constant 0 : i32
    return %arg0, %arg1, %c0_i32, %c0_i32_0 : i32, i32, i32, i32
  }
}

</mosaic_0001>

<llo_original>
// kernel: tpu_custom_call.1
$region0: #{tpu_custom_call.1}
  #allocation0 [shape = 'u32[]', space=smem, size = 0x4, offset = 0x4, fixed_abs, tag = 'smem constant byte address 0x4 - core index']
  #allocation1 [shape = 'u32[144,128]{1,0:T(1,128)}', space=vmem, size = 0x12000, scoped, tag = 'internal scratch']
  #allocation2 [shape = 'f32[1,64]{1,0:T(1,128)}', space=vmem, size = 0x200, scoped, tag = 'scratch operand']
  #allocation3 [shape = 'f32[1,64]{1,0:T(1,128)}', space=vmem, size = 0x200, scoped, tag = 'scratch operand']
  #allocation4 [shape = 'f32[1,64]{1,0:T(1,128)}', space=vmem, size = 0x200, scoped, tag = 'scratch operand']
  %s0 = inlined_call_operand.vmem [shape: f32[2,37,111], index: 0, kind: input, shape index: {}]
  %s1 = inlined_call_operand.vmem [shape: f32[2,37,111], index: 1, kind: input, shape index: {}]
  %s2 = inlined_call_operand.vmem [shape: f32[111,128], index: 2, kind: input, shape index: {}]
  %s3 = inlined_call_operand.vmem [shape: f32[2,1,1,1], index: 3, kind: output, shape index: {0}]
  %s4 = inlined_call_operand.vmem [shape: f32[2,1,1,1], index: 4, kind: output, shape index: {1}]
  %s5 = inlined_call_operand.vmem [shape: f32[2,1,1,1], index: 5, kind: output, shape index: {2}]
  %6 = xla_tuple %s3, %s4, %s5
  %s7 = sld [smem:[#allocation0]]
  $region69: #{tpu_custom_call.1} parent=0
    _
  %s9 = ssub.s32 1, %s7
  %s10 = scalar_select 0, %s9, %s7
  loop: start=0, step=1, limit=4
  $region2: #{tpu_custom_call.1} parent=0 // loop_pre_header
    _
  $region3: #{tpu_custom_call.1} parent=0 // loop_header
    %s12 = sphi 0, %s16
    %p13 = scmp.ge.s32.totalorder %s12, 4
    %s19 = sphi 0, %s38
    %s20 = sphi 0, %s34
    %s21 = sphi 0, %s30
    %s22 = sphi 0, %s19
    %s23 = sphi 0, %s20
    %s24 = sphi 0, %s21
    %s25 = sphi 0, %s22
    %s26 = sphi 0, %s23
    %s27 = sphi 0, %s24
    %s49 = sphi 0, %s51
    %s52 = sphi 0, %s49
    %s53 = sphi 0, %s52
    %s69 = sphi 0, %s53
    %s83 = sphi 0, %s85
    %s86 = sphi 0, %s83
    %s87 = sphi 0, %s86
    %s103 = sphi 0, %s87
    %s107 = sphi 0, %s107
    %s109 = sphi 0, %s107
    %s110 = sphi 0, %s109
    %s124 = sphi 0, %s110
    %s132 = sphi 0, %s134
    %s135 = sphi 0, %s132
    %s136 = sphi 0, %s135
    %s152 = sphi 0, %s136
    %s160 = sphi 0, %s162
    %s163 = sphi 0, %s160
    %s164 = sphi 0, %s163
    %s180 = sphi 0, %s164
    %s188 = sphi 0, %s190
    %s191 = sphi 0, %s188
    %s192 = sphi 0, %s191
    %s208 = sphi 0, %s192
  $region4: #{tpu_custom_call.1} parent=0 // loop_header_branch
    %15 = sbr.rel (%p13) target = $region8
  $region5: #{tpu_custom_call.1} parent=0 // loop_body
    %s17 = ssub.s32 %s12, 1
    %s18 = ssub.s32 %s12, 2
    %s28 = sadd.s32 1, %s21
    %p29 = scmp.ge.s32.totalorder %s28, 1
    %s30 = scalar_select %p29, 0, %s28
    %s31 = sadd.s32 1, %s20
    %s32 = scalar_select %p29, %s31, %s20
    %p33 = scmp.ge.s32.totalorder %s32, 1
    %s34 = scalar_select %p33, 0, %s32
    %s35 = sadd.s32 1, %s19
    %s36 = scalar_select %p33, %s35, %s19
    %p37 = scmp.ge.s32.totalorder %s36, 2
    %s38 = scalar_select %p37, 0, %s36
    %s39 = sadd.s32 %s20, %s21
    %p40 = scmp.lt.s32.totalorder %s39, 0
    %s41 = scalar_select %p40, %s39, 0
    %s42 = sadd.s32 %s34, %s30
    %p43 = scmp.lt.s32.totalorder %s42, 0
    %s44 = scalar_select %p43, %s42, 0
    %s45 = ssub.s32 %s19, %s38
    %s46 = ssub.s32 %s41, %s44
    %s47 = sor.u32 %s45, %s46
    %p48 = scmp.eq.s32.totalorder %s47, 0
    %s50 = sadd.s32 %s49, 1
    %s51 = scalar_select %p48, %s49, %s50
    %p54 = pneg %p48
    %p55 = scmp.eq.s32.totalorder %s12, 1
    %p56 = por %p54, %p55
    %p57 = scmp.ne.s32.totalorder %s49, %s52
    %p58 = scmp.eq.s32.totalorder %s12, 0
    %p59 = por %p57, %p58
    %p60 = scmp.ne.s32.totalorder %s49, %s52
    %p61 = scmp.eq.s32.totalorder %s17, 1
    %p62 = por %p60, %p61
    %p63 = scmp.ne.s32.totalorder %s52, %s53
    %p64 = scmp.eq.s32.totalorder %s17, 0
    %p65 = por %p63, %p64
    %p66 = scmp.ne.s32.totalorder %s52, %s53
    %p67 = scmp.eq.s32.totalorder %s18, 1
    %p68 = por %p66, %p67
    %p70 = scmp.ne.s32.totalorder %s53, %s69
    %p71 = scmp.eq.s32.totalorder %s18, 0
    %p72 = por %p70, %p71
    %s73 = sadd.s32 %s20, %s21
    %p74 = scmp.lt.s32.totalorder %s73, 0
    %s75 = scalar_select %p74, %s73, 0
    %s76 = sadd.s32 %s34, %s30
    %p77 = scmp.lt.s32.totalorder %s76, 0
    %s78 = scalar_select %p77, %s76, 0
    %s79 = ssub.s32 %s19, %s38
    %s80 = ssub.s32 %s75, %s78
    %s81 = sor.u32 %s79, %s80
    %p82 = scmp.eq.s32.totalorder %s81, 0
    %s84 = sadd.s32 %s83, 1
    %s85 = scalar_select %p82, %s83, %s84
    %p88 = pneg %p82
    %p89 = scmp.eq.s32.totalorder %s12, 1
    %p90 = por %p88, %p89
    %p91 = scmp.ne.s32.totalorder %s83, %s86
    %p92 = scmp.eq.s32.totalorder %s12, 0
    %p93 = por %p91, %p92
    %p94 = scmp.ne.s32.totalorder %s83, %s86
    %p95 = scmp.eq.s32.totalorder %s17, 1
    %p96 = por %p94, %p95
    %p97 = scmp.ne.s32.totalorder %s86, %s87
    %p98 = scmp.eq.s32.totalorder %s17, 0
    %p99 = por %p97, %p98
    %p100 = scmp.ne.s32.totalorder %s86, %s87
    %p101 = scmp.eq.s32.totalorder %s18, 1
    %p102 = por %p100, %p101
    %p104 = scmp.ne.s32.totalorder %s87, %s103
    %p105 = scmp.eq.s32.totalorder %s18, 0
    %p106 = por %p104, %p105
    %s108 = sadd.s32 %s107, 1
    %p111 = scmp.eq.s32.totalorder %s12, 1
    %p112 = scmp.ne.s32.totalorder %s107, %s109
    %p113 = scmp.eq.s32.totalorder %s12, 0
    %p114 = por %p112, %p113
    %p115 = scmp.ne.s32.totalorder %s107, %s109
    %p116 = scmp.eq.s32.totalorder %s17, 1
    %p117 = por %p115, %p116
    %p118 = scmp.ne.s32.totalorder %s109, %s110
    %p119 = scmp.eq.s32.totalorder %s17, 0
    %p120 = por %p118, %p119
    %p121 = scmp.ne.s32.totalorder %s109, %s110
    %p122 = scmp.eq.s32.totalorder %s18, 1
    %p123 = por %p121, %p122
    %p125 = scmp.ne.s32.totalorder %s110, %s124
    %p126 = scmp.eq.s32.totalorder %s18, 0
    %p127 = por %p125, %p126
    %s128 = ssub.s32 %s19, %s38
    %s129 = ssub.s32 %s20, %s34
    %s130 = sor.u32 %s128, %s129
    %p131 = scmp.eq.s32.totalorder %s130, 0
    %s133 = sadd.s32 %s132, 1
    %s134 = scalar_select %p131, %s132, %s133
    %p137 = pneg %p131
    %p138 = scmp.eq.s32.totalorder %s12, 1
    %p139 = por %p137, %p138
    %p140 = scmp.ne.s32.totalorder %s132, %s135
    %p141 = scmp.eq.s32.totalorder %s12, 0
    %p142 = por %p140, %p141
    %p143 = scmp.ne.s32.totalorder %s132, %s135
    %p144 = scmp.eq.s32.totalorder %s17, 1
    %p145 = por %p143, %p144
    %p146 = scmp.ne.s32.totalorder %s135, %s136
    %p147 = scmp.eq.s32.totalorder %s17, 0
    %p148 = por %p146, %p147
    %p149 = scmp.ne.s32.totalorder %s135, %s136
    %p150 = scmp.eq.s32.totalorder %s18, 1
    %p151 = por %p149, %p150
    %p153 = scmp.ne.s32.totalorder %s136, %s152
    %p154 = scmp.eq.s32.totalorder %s18, 0
    %p155 = por %p153, %p154
    %s156 = ssub.s32 %s19, %s38
    %s157 = ssub.s32 %s20, %s34
    %s158 = sor.u32 %s156, %s157
    %p159 = scmp.eq.s32.totalorder %s158, 0
    %s161 = sadd.s32 %s160, 1
    %s162 = scalar_select %p159, %s160, %s161
    %p165 = pneg %p159
    %p166 = scmp.eq.s32.totalorder %s12, 1
    %p167 = por %p165, %p166
    %p168 = scmp.ne.s32.totalorder %s160, %s163
    %p169 = scmp.eq.s32.totalorder %s12, 0
    %p170 = por %p168, %p169
    %p171 = scmp.ne.s32.totalorder %s160, %s163
    %p172 = scmp.eq.s32.totalorder %s17, 1
    %p173 = por %p171, %p172
    %p174 = scmp.ne.s32.totalorder %s163, %s164
    %p175 = scmp.eq.s32.totalorder %s17, 0
    %p176 = por %p174, %p175
    %p177 = scmp.ne.s32.totalorder %s163, %s164
    %p178 = scmp.eq.s32.totalorder %s18, 1
    %p179 = por %p177, %p178
    %p181 = scmp.ne.s32.totalorder %s164, %s180
    %p182 = scmp.eq.s32.totalorder %s18, 0
    %p183 = por %p181, %p182
    %s184 = ssub.s32 %s19, %s38
    %s185 = ssub.s32 %s20, %s34
    %s186 = sor.u32 %s184, %s185
    %p187 = scmp.eq.s32.totalorder %s186, 0
    %s189 = sadd.s32 %s188, 1
    %s190 = scalar_select %p187, %s188, %s189
    %p193 = pneg %p187
    %p194 = scmp.eq.s32.totalorder %s12, 1
    %p195 = por %p193, %p194
    %p196 = scmp.ne.s32.totalorder %s188, %s191
    %p197 = scmp.eq.s32.totalorder %s12, 0
    %p198 = por %p196, %p197
    %p199 = scmp.ne.s32.totalorder %s188, %s191
    %p200 = scmp.eq.s32.totalorder %s17, 1
    %p201 = por %p199, %p200
    %p202 = scmp.ne.s32.totalorder %s191, %s192
    %p203 = scmp.eq.s32.totalorder %s17, 0
    %p204 = por %p202, %p203
    %p205 = scmp.ne.s32.totalorder %s191, %s192
    %p206 = scmp.eq.s32.totalorder %s18, 1
    %p207 = por %p205, %p206
    %p209 = scmp.ne.s32.totalorder %s192, %s208
    %p210 = scmp.eq.s32.totalorder %s18, 0
    %p211 = por %p209, %p210
    %p212 = scmp.le.s32.totalorder 1, %s12
    %p213 = scmp.lt.s32.totalorder %s12, 3
    %p214 = pnand %p212, %p213
    %p215 = pneg %p214
    // Predicated region
    $region9: #{tpu_custom_call.1} parent=5 // pred_check
      _
    $region10: #{tpu_custom_call.1} parent=5 // pred_check_branch
      %217 = sbr.rel (%p214) target = $region12
    $region11: #{tpu_custom_call.1} parent=5 // pred_region
      %s218 = ssub.s32 %s12, 1
      // Predicated region
      $region13: #{tpu_custom_call.1} parent=11 // pred_check
        %p219 = pneg %p120
      $region14: #{tpu_custom_call.1} parent=11 // pred_check_branch
        %221 = sbr.rel (%p219) target = $region16
      $region15: #{tpu_custom_call.1} parent=11 // pred_region
        _
      $region16: #{tpu_custom_call.1} parent=11 // pred_fallthru
        _
    $region12: #{tpu_custom_call.1} parent=5 // pred_fallthru
      _
    %p222 = scmp.lt.s32.totalorder %s12, 2
    // Predicated region
    $region17: #{tpu_custom_call.1} parent=5 // pred_check
      %p223 = pneg %p222
    $region18: #{tpu_custom_call.1} parent=5 // pred_check_branch
      %225 = sbr.rel (%p223) target = $region20
    $region19: #{tpu_custom_call.1} parent=5 // pred_region
      // Predicated region
      $region21: #{tpu_custom_call.1} parent=19 // pred_check
        %p226 = pneg %p59
      $region22: #{tpu_custom_call.1} parent=19 // pred_check_branch
        %228 = sbr.rel (%p226) target = $region24
      $region23: #{tpu_custom_call.1} parent=19 // pred_region
        %s229 = sadd.s32 %s20, %s21
        %p230 = scmp.lt.s32.totalorder %s229, 0
        %s231 = scalar_select %p230, %s229, 0
        %s232 = smul.u32 5, %s231
        %p233 = scmp.lt.s32.totalorder %s19, 1
        %s234 = scalar_select %p233, %s19, 1
        %p235 = scmp.lt.s32.totalorder %s232, 4
        %s236 = scalar_select %p235, %s232, 4
        %s237 = smul.addr %s234, 5
        %s238 = sadd.s32 %s236, %s237
        %s239 = smul.addr %s238, 8
        %s240 = scalar_lea.vmem %s0, %s239
        %s241 = sadd.s32 %s20, %s21
        %p242 = scmp.lt.s32.totalorder %s241, 0
        %s243 = scalar_select %p242, %s241, 0
        %s244 = smul.u32 5, %s243
      $region24: #{tpu_custom_call.1} parent=19 // pred_fallthru
        _
      // Predicated region
      $region25: #{tpu_custom_call.1} parent=19 // pred_check
        %p245 = pneg %p93
      $region26: #{tpu_custom_call.1} parent=19 // pred_check_branch
        %247 = sbr.rel (%p245) target = $region28
      $region27: #{tpu_custom_call.1} parent=19 // pred_region
        %s248 = sadd.s32 %s20, %s21
        %p249 = scmp.lt.s32.totalorder %s248, 0
        %s250 = scalar_select %p249, %s248, 0
        %s251 = smul.u32 5, %s250
        %p252 = scmp.lt.s32.totalorder %s19, 1
        %s253 = scalar_select %p252, %s19, 1
        %p254 = scmp.lt.s32.totalorder %s251, 4
        %s255 = scalar_select %p254, %s251, 4
        %s256 = smul.addr %s253, 5
        %s257 = sadd.s32 %s255, %s256
        %s258 = smul.addr %s257, 8
        %s259 = scalar_lea.vmem %s1, %s258
        %s260 = sadd.s32 %s20, %s21
        %p261 = scmp.lt.s32.totalorder %s260, 0
        %s262 = scalar_select %p261, %s260, 0
        %s263 = smul.u32 5, %s262
      $region28: #{tpu_custom_call.1} parent=19 // pred_fallthru
        _
    $region20: #{tpu_custom_call.1} parent=5 // pred_fallthru
      _
    %p264 = scmp.le.s32.totalorder 1, %s12
    %p265 = scmp.lt.s32.totalorder %s12, 3
    %p266 = pnand %p264, %p265
    %p267 = pneg %p266
    // Predicated region
    $region29: #{tpu_custom_call.1} parent=5 // pred_check
      _
    $region30: #{tpu_custom_call.1} parent=5 // pred_check_branch
      %269 = sbr.rel (%p266) target = $region32
    $region31: #{tpu_custom_call.1} parent=5 // pred_region
      %s270 = ssub.s32 %s12, 1
      %s271 = sadd.s32 %s23, %s24
      %p272 = scmp.lt.s32.totalorder %s271, 0
      %s273 = scalar_select %p272, %s271, 0
      %s274 = smul.u32 5, %s273
      %p275 = scmp.lt.s32.totalorder %s22, 1
      %s276 = scalar_select %p275, %s22, 1
      %p277 = scmp.lt.s32.totalorder %s274, 4
      %s278 = scalar_select %p277, %s274, 4
      %s279 = smul.addr %s276, 5
      %s280 = sadd.s32 %s278, %s279
      %s281 = smul.addr %s280, 8
      %s282 = scalar_lea.vmem %s0, %s281
      %p283 = pneg %p65
      %p284 = pneg %p62
      %s285 = sadd.s32 %s23, %s24
      %p286 = scmp.lt.s32.totalorder %s285, 0
      %s287 = scalar_select %p286, %s285, 0
      %s288 = smul.u32 5, %s287
      %p289 = scmp.lt.s32.totalorder %s22, 1
      %s290 = scalar_select %p289, %s22, 1
      %p291 = scmp.lt.s32.totalorder %s288, 4
      %s292 = scalar_select %p291, %s288, 4
      %s293 = smul.addr %s290, 5
      %s294 = sadd.s32 %s292, %s293
      %s295 = smul.addr %s294, 8
      %s296 = scalar_lea.vmem %s1, %s295
      %p297 = pneg %p99
      %p298 = pneg %p96
      %p299 = pneg %p120
      %p300 = pneg %p117
      %p301 = pneg %p148
      %p302 = pneg %p145
      %p303 = scmp.lt.s32.totalorder %s22, 1
      %s304 = scalar_select %p303, %s22, 1
      %p305 = scmp.lt.s32.totalorder %s23, 0
      %s306 = scalar_select %p305, %s23, 0
      %s307 = sadd.s32 %s306, %s304
      %s308 = scalar_lea.vmem %s3, %s307
      %p309 = pneg %p176
      %p310 = pneg %p173
      %p311 = scmp.lt.s32.totalorder %s22, 1
      %s312 = scalar_select %p311, %s22, 1
      %p313 = scmp.lt.s32.totalorder %s23, 0
      %s314 = scalar_select %p313, %s23, 0
      %s315 = sadd.s32 %s314, %s312
      %s316 = scalar_lea.vmem %s4, %s315
      %p317 = pneg %p204
      %p318 = pneg %p201
      %p319 = scmp.lt.s32.totalorder %s22, 1
      %s320 = scalar_select %p319, %s22, 1
      %p321 = scmp.lt.s32.totalorder %s23, 0
      %s322 = scalar_select %p321, %s23, 0
      %s323 = sadd.s32 %s322, %s320
      %s324 = scalar_lea.vmem %s5, %s323
      %s325 = sadd.s32 %s23, %s24
      %p326 = scmp.lt.s32.totalorder %s325, 0
      %s327 = scalar_select %p326, %s325, 0
      %s328 = smul.u32 5, %s327
      %p329 = scmp.lt.s32.totalorder %s22, 1
      %s330 = scalar_select %p329, %s22, 1
      %p331 = scmp.lt.s32.totalorder %s328, 4
      %s332 = scalar_select %p331, %s328, 4
      %s333 = smul.addr %s330, 5
      %s334 = sadd.s32 %s332, %s333
      %s335 = smul.addr %s334, 8
      %s336 = scalar_lea.vmem %s0, %s335
      %s337 = sadd.s32 %s23, %s24
      %p338 = scmp.lt.s32.totalorder %s337, 0
      %s339 = scalar_select %p338, %s337, 0
      %s340 = smul.u32 5, %s339
      %s341 = sadd.s32 %s23, %s24
      %p342 = scmp.lt.s32.totalorder %s341, 0
      %s343 = scalar_select %p342, %s341, 0
      %s344 = smul.u32 5, %s343
      %p345 = scmp.lt.s32.totalorder %s22, 1
      %s346 = scalar_select %p345, %s22, 1
      %p347 = scmp.lt.s32.totalorder %s344, 4
      %s348 = scalar_select %p347, %s344, 4
      %s349 = smul.addr %s346, 5
      %s350 = sadd.s32 %s348, %s349
      %s351 = smul.addr %s350, 8
      %s352 = scalar_lea.vmem %s1, %s351
      %s353 = sadd.s32 %s23, %s24
      %p354 = scmp.lt.s32.totalorder %s353, 0
      %s355 = scalar_select %p354, %s353, 0
      %s356 = smul.u32 5, %s355
      %p357 = scmp.lt.s32.totalorder %s22, 1
      %s358 = scalar_select %p357, %s22, 1
      %p359 = scmp.lt.s32.totalorder %s23, 0
      %s360 = scalar_select %p359, %s23, 0
      %s361 = sadd.s32 %s360, %s358
      %s362 = scalar_lea.vmem %s3, %s361
      %p363 = scmp.lt.s32.totalorder %s22, 1
      %s364 = scalar_select %p363, %s22, 1
      %p365 = scmp.lt.s32.totalorder %s23, 0
      %s366 = scalar_select %p365, %s23, 0
      %s367 = sadd.s32 %s366, %s364
      %s368 = scalar_lea.vmem %s4, %s367
      %p369 = scmp.lt.s32.totalorder %s22, 1
      %s370 = scalar_select %p369, %s22, 1
      %p371 = scmp.lt.s32.totalorder %s23, 0
      %s372 = scalar_select %p371, %s23, 0
      %s373 = sadd.s32 %s372, %s370
      %s374 = scalar_lea.vmem %s5, %s373
      %p375 = scmp.eq.s32.totalorder %s24, 0
      // Predicated region
      $region33: #{tpu_custom_call.1} parent=31 // pred_check
        %p376 = pneg %p375
      $region34: #{tpu_custom_call.1} parent=31 // pred_check_branch
        %378 = sbr.rel (%p376) target = $region36
      $region35: #{tpu_custom_call.1} parent=31 // pred_region
        %vm379 = vcmask 516096
        %380 = vst.msk [vmem:[#allocation2] sm:$0x1] %vm379, 0.0
        %381 = vst.msk [vmem:[#allocation3] sm:$0x1] %vm379, 0.0
        %382 = vst.msk [vmem:[#allocation4] sm:$0x1] %vm379, 0.0
      $region36: #{tpu_custom_call.1} parent=31 // pred_fallthru
        _
      %v383 = vld [vmem:[%s336] sm:$0xff]
      %v384 = vld [vmem:[%s336 + $0x8] sm:$0xff]
      %v385 = vld [vmem:[%s336 + $0x10] sm:$0xff]
      %v386 = vld [vmem:[%s336 + $0x18] sm:$0xff]
      %v387 = vld [vmem:[%s336 + $0x20] sm:$0x1f]
      %v388 = vld [vmem:[%s352] sm:$0xff]
      %v389 = vld [vmem:[%s352 + $0x8] sm:$0xff]
      %v390 = vld [vmem:[%s352 + $0x10] sm:$0xff]
      %v391 = vld [vmem:[%s352 + $0x18] sm:$0xff]
      %v392 = vld [vmem:[%s352 + $0x20] sm:$0x1f]
      %v393 = vld [vmem:[%s2] sm:$0xff]
      %v394 = vld [vmem:[%s2 + $0x8] sm:$0xff]
      %v395 = vld [vmem:[%s2 + $0x10] sm:$0xff]
      %v396 = vld [vmem:[%s2 + $0x18] sm:$0xff]
      %v397 = vld [vmem:[%s2 + $0x20] sm:$0xff]
      %v398 = vld [vmem:[%s2 + $0x28] sm:$0xff]
      %v399 = vld [vmem:[%s2 + $0x30] sm:$0xff]
      %v400 = vld [vmem:[%s2 + $0x38] sm:$0xff]
      %v401 = vld [vmem:[%s2 + $0x40] sm:$0xff]
      %v402 = vld [vmem:[%s2 + $0x48] sm:$0xff]
      %v403 = vld [vmem:[%s2 + $0x50] sm:$0xff]
      %v404 = vld [vmem:[%s2 + $0x58] sm:$0xff]
      %v405 = vld [vmem:[%s2 + $0x60] sm:$0xff]
      %v406 = vld [vmem:[%s2 + $0x68] sm:$0x7f]
      %vm407 = vcmask 908288
      %v409 = vsel %vm407, %v383, 0
      %v412 = vsel %vm407, %v384, 0
      %v415 = vsel %vm407, %v385, 0
      %v418 = vsel %vm407, %v386, 0
      %v421 = vsel %vm407, %v387, 0
      %vm423 = vcmask 1046528
      %v425 = vsel %vm423, %v406, 0
      %427 = vmatprep.subr.mxu0 0.0
      %428 = vmatpush1.msra.mxu0 %v393
      %429 = vmatprep.subr.mxu0 0.0
      %430 = vmatpush1.msra.mxu0 %v394
      %431 = vmatprep.subr.mxu0 0.0
      %432 = vmatpush1.msra.mxu0 %v395
      %433 = vmatprep.subr.mxu0 0.0
      %434 = vmatpush1.msra.mxu0 %v396
      %435 = vmatprep.subr.mxu0 0.0
      %436 = vmatpush1.msra.mxu0 %v397
      %437 = vmatprep.subr.mxu0 0.0
      %438 = vmatpush1.msra.mxu0 %v398
      %439 = vmatprep.subr.mxu0 0.0
      %440 = vmatpush1.msra.mxu0 %v399
      %441 = vmatprep.subr.mxu0 0.0
      %442 = vmatpush1.msra.mxu0 %v400
      %443 = vmatprep.subr.mxu0 0.0
      %444 = vmatpush1.msra.mxu0 %v401
      %445 = vmatprep.subr.mxu0 0.0
      %446 = vmatpush1.msra.mxu0 %v402
      %447 = vmatprep.subr.mxu0 0.0
      %448 = vmatpush1.msra.mxu0 %v403
      %449 = vmatprep.subr.mxu0 0.0
      %450 = vmatpush1.msra.mxu0 %v404
      %451 = vmatprep.subr.mxu0 0.0
      %452 = vmatpush1.msra.mxu0 %v405
      %453 = vmatprep.subr.mxu0 0.0
      %454 = vmatpush1.msra.mxu0 %v425
      %455 = vmatprep.subr.mxu0 0.0
      %456 = vmatpush1.msra.mxu0 0.0
      %457 = vmatprep.subr.mxu0 0.0
      %458 = vmatpush1.msra.mxu0 0.0
      %459 = vmatprep.subr.mxu0 0.0
      %460 = vmatpush1.msra.mxu0 0.0
      %461 = vmatprep.subr.mxu0 0.0
      %462 = vmatpush1.msra.mxu0 0.0
      %463 = vmatprep.subr.mxu0 0.0
      %464 = vmatpush1.msra.mxu0 0.0
      %465 = vmatprep.subr.mxu0 0.0
      %466 = vmatpush1.msra.mxu0 0.0
      %467 = vmatprep.subr.mxu0 0.0
      %468 = vmatpush1.msra.mxu0 0.0
      %469 = vmatprep.subr.mxu0 0.0
      %470 = vmatpush1.msra.mxu0 0.0
      %471 = vmatprep.subr.mxu0 0.0
      %472 = vmatpush1.msra.mxu0 0.0
      %473 = vmatprep.subr.mxu0 0.0
      %474 = vmatpush1.msra.mxu0 0.0
      %475 = vmatprep.subr.mxu0 0.0
      %476 = vmatpush1.msra.mxu0 0.0
      %477 = vmatprep.subr.mxu0 0.0
      %478 = vmatpush1.msra.mxu0 0.0
      %479 = vmatprep.subr.mxu0 0.0
      %480 = vmatpush1.msra.mxu0 0.0
      %481 = vmatprep.subr.mxu0 0.0
      %482 = vmatpush1.msra.mxu0 0.0
      %483 = vmatprep.subr.mxu0 0.0
      %484 = vmatpush1.msra.mxu0 0.0
      %485 = vmatprep.subr.mxu0 0.0
      %486 = vmatpush1.msra.mxu0 0.0
      %487 = vmatprep.subr.mxu0 0.0
      %488 = vmatpush1.msra.mxu0 0.0
      %489 = vmatprep.subr.mxu0 0.0
      %490 = vmatpush1.msra.mxu0 0.0
      %491 = vmatprep.mubr.f32.mxu0 0.0
      %492 = vmatmul.mubr.f32.gmra.mrb[0].mxu0 %v409
      %v493 = vpop.f32.mrb[0].mxu0
      %v494 = vadd.f32 0.0, %v493
      %v495 = vpop.f32.mrb[0].mxu0
      %496 = vmatprep.mubr.f32.mxu0 0.0
      %497 = vmatmul.mubr.f32.gmra.mrb[0].mxu0 %v412
      %v498 = vpop.f32.mrb[0].mxu0
      %v499 = vadd.f32 0.0, %v498
      %v500 = vpop.f32.mrb[0].mxu0
      %501 = vmatprep.mubr.f32.mxu0 0.0
      %502 = vmatmul.mubr.f32.gmra.mrb[0].mxu0 %v415
      %v503 = vpop.f32.mrb[0].mxu0
      %v504 = vadd.f32 0.0, %v503
      %v505 = vpop.f32.mrb[0].mxu0
      %506 = vmatprep.mubr.f32.mxu0 0.0
      %507 = vmatmul.mubr.f32.gmra.mrb[0].mxu0 %v418
      %v508 = vpop.f32.mrb[0].mxu0
      %v509 = vadd.f32 0.0, %v508
      %v510 = vpop.f32.mrb[0].mxu0
      %511 = vmatprep.mubr.f32.mxu0 0.0
      %512 = vmatmul.mubr.f32.gmra.mrb[0].mxu0 %v421
      %v513 = vpop.f32.mrb[0].mxu0
      %v514 = vadd.f32 0.0, %v513
      %v515 = vpop.f32.mrb[0].mxu0
      %516 = vdwg.mxu0
      %v518 = vsel %vm407, %v388, 0
      %v521 = vsel %vm407, %v389, 0
      %v524 = vsel %vm407, %v390, 0
      %v527 = vsel %vm407, %v391, 0
      %v530 = vsel %vm407, %v392, 0
      %532 = vmatprep.subr.mxu0 0.0
      %533 = vmatpush1.msra.mxu0 %v393
      %534 = vmatprep.subr.mxu0 0.0
      %535 = vmatpush1.msra.mxu0 %v394
      %536 = vmatprep.subr.mxu0 0.0
      %537 = vmatpush1.msra.mxu0 %v395
      %538 = vmatprep.subr.mxu0 0.0
      %539 = vmatpush1.msra.mxu0 %v396
      %540 = vmatprep.subr.mxu0 0.0
      %541 = vmatpush1.msra.mxu0 %v397
      %542 = vmatprep.subr.mxu0 0.0
      %543 = vmatpush1.msra.mxu0 %v398
      %544 = vmatprep.subr.mxu0 0.0
      %545 = vmatpush1.msra.mxu0 %v399
      %546 = vmatprep.subr.mxu0 0.0
      %547 = vmatpush1.msra.mxu0 %v400
      %548 = vmatprep.subr.mxu0 0.0
      %549 = vmatpush1.msra.mxu0 %v401
      %550 = vmatprep.subr.mxu0 0.0
      %551 = vmatpush1.msra.mxu0 %v402
      %552 = vmatprep.subr.mxu0 0.0
      %553 = vmatpush1.msra.mxu0 %v403
      %554 = vmatprep.subr.mxu0 0.0
      %555 = vmatpush1.msra.mxu0 %v404
      %556 = vmatprep.subr.mxu0 0.0
      %557 = vmatpush1.msra.mxu0 %v405
      %558 = vmatprep.subr.mxu0 0.0
      %559 = vmatpush1.msra.mxu0 %v425
      %560 = vmatprep.subr.mxu0 0.0
      %561 = vmatpush1.msra.mxu0 0.0
      %562 = vmatprep.subr.mxu0 0.0
      %563 = vmatpush1.msra.mxu0 0.0
      %564 = vmatprep.subr.mxu0 0.0
      %565 = vmatpush1.msra.mxu0 0.0
      %566 = vmatprep.subr.mxu0 0.0
      %567 = vmatpush1.msra.mxu0 0.0
      %568 = vmatprep.subr.mxu0 0.0
      %569 = vmatpush1.msra.mxu0 0.0
      %570 = vmatprep.subr.mxu0 0.0
      %571 = vmatpush1.msra.mxu0 0.0
      %572 = vmatprep.subr.mxu0 0.0
      %573 = vmatpush1.msra.mxu0 0.0
      %574 = vmatprep.subr.mxu0 0.0
      %575 = vmatpush1.msra.mxu0 0.0
      %576 = vmatprep.subr.mxu0 0.0
      %577 = vmatpush1.msra.mxu0 0.0
      %578 = vmatprep.subr.mxu0 0.0
      %579 = vmatpush1.msra.mxu0 0.0
      %580 = vmatprep.subr.mxu0 0.0
      %581 = vmatpush1.msra.mxu0 0.0
      %582 = vmatprep.subr.mxu0 0.0
      %583 = vmatpush1.msra.mxu0 0.0
      %584 = vmatprep.subr.mxu0 0.0
      %585 = vmatpush1.msra.mxu0 0.0
      %586 = vmatprep.subr.mxu0 0.0
      %587 = vmatpush1.msra.mxu0 0.0
      %588 = vmatprep.subr.mxu0 0.0
      %589 = vmatpush1.msra.mxu0 0.0
      %590 = vmatprep.subr.mxu0 0.0
      %591 = vmatpush1.msra.mxu0 0.0
      %592 = vmatprep.subr.mxu0 0.0
      %593 = vmatpush1.msra.mxu0 0.0
      %594 = vmatprep.subr.mxu0 0.0
      %595 = vmatpush1.msra.mxu0 0.0
      %596 = vmatprep.mubr.f32.mxu0 0.0
      %597 = vmatmul.mubr.f32.gmra.mrb[0].mxu0 %v518
      %v598 = vpop.f32.mrb[0].mxu0
      %v599 = vadd.f32 0.0, %v598
      %v600 = vpop.f32.mrb[0].mxu0
      %601 = vmatprep.mubr.f32.mxu0 0.0
      %602 = vmatmul.mubr.f32.gmra.mrb[0].mxu0 %v521
      %v603 = vpop.f32.mrb[0].mxu0
      %v604 = vadd.f32 0.0, %v603
      %v605 = vpop.f32.mrb[0].mxu0
      %606 = vmatprep.mubr.f32.mxu0 0.0
      %607 = vmatmul.mubr.f32.gmra.mrb[0].mxu0 %v524
      %v608 = vpop.f32.mrb[0].mxu0
      %v609 = vadd.f32 0.0, %v608
      %v610 = vpop.f32.mrb[0].mxu0
      %611 = vmatprep.mubr.f32.mxu0 0.0
      %612 = vmatmul.mubr.f32.gmra.mrb[0].mxu0 %v527
      %v613 = vpop.f32.mrb[0].mxu0
      %v614 = vadd.f32 0.0, %v613
      %v615 = vpop.f32.mrb[0].mxu0
      %616 = vmatprep.mubr.f32.mxu0 0.0
      %617 = vmatmul.mubr.f32.gmra.mrb[0].mxu0 %v530
      %v618 = vpop.f32.mrb[0].mxu0
      %v619 = vadd.f32 0.0, %v618
      %v620 = vpop.f32.mrb[0].mxu0
      %621 = vdwg.mxu0
      %v622 = vmul.f32 %v494, %v494
      %v623 = vmul.f32 %v499, %v499
      %v624 = vmul.f32 %v504, %v504
      %v625 = vmul.f32 %v509, %v509
      %v626 = vmul.f32 %v514, %v514
      %632 = vrot.lane.b32.xlu0 %v622, 64
      %v633 = vpop.permute.xlu0 %632
      %634 = vrot.lane.b32.xlu0 %v623, 64
      %v635 = vpop.permute.xlu0 %634
      %636 = vrot.lane.b32.xlu0 %v624, 64
      %v637 = vpop.permute.xlu0 %636
      %638 = vrot.lane.b32.xlu0 %v625, 64
      %v639 = vpop.permute.xlu0 %638
      %640 = vrot.lane.b32.xlu0 %v626, 64
      %v641 = vpop.permute.xlu0 %640
      %v647 = vadd.f32 %v622, %v633
      %v648 = vadd.f32 %v623, %v635
      %v649 = vadd.f32 %v624, %v637
      %v650 = vadd.f32 %v625, %v639
      %v651 = vadd.f32 %v626, %v641
      %v652 = vrsqrt.pop %v647
      %v653 = vmul.f32 %v647, %v652
      %vm654 = vcmp.eq.f32.partialorder %v647, inf
      %v655 = vsel %vm654, %v647, %v653
      %vm656 = vcmp.eq.f32.partialorder %v647, 0.0
      %v657 = vand.u32 %v647, 2147483648
      %v658 = vsel %vm656, %v657, %v655
      %v659 = vrsqrt.pop %v648
      %v660 = vmul.f32 %v648, %v659
      %vm661 = vcmp.eq.f32.partialorder %v648, inf
      %v662 = vsel %vm661, %v648, %v660
      %vm663 = vcmp.eq.f32.partialorder %v648, 0.0
      %v664 = vand.u32 %v648, 2147483648
      %v665 = vsel %vm663, %v664, %v662
      %v666 = vrsqrt.pop %v649
      %v667 = vmul.f32 %v649, %v666
      %vm668 = vcmp.eq.f32.partialorder %v649, inf
      %v669 = vsel %vm668, %v649, %v667
      %vm670 = vcmp.eq.f32.partialorder %v649, 0.0
      %v671 = vand.u32 %v649, 2147483648
      %v672 = vsel %vm670, %v671, %v669
      %v673 = vrsqrt.pop %v650
      %v674 = vmul.f32 %v650, %v673
      %vm675 = vcmp.eq.f32.partialorder %v650, inf
      %v676 = vsel %vm675, %v650, %v674
      %vm677 = vcmp.eq.f32.partialorder %v650, 0.0
      %v678 = vand.u32 %v650, 2147483648
      %v679 = vsel %vm677, %v678, %v676
      %v680 = vrsqrt.pop %v651
      %v681 = vmul.f32 %v651, %v680
      %vm682 = vcmp.eq.f32.partialorder %v651, inf
      %v683 = vsel %vm682, %v651, %v681
      %vm684 = vcmp.eq.f32.partialorder %v651, 0.0
      %v685 = vand.u32 %v651, 2147483648
      %v686 = vsel %vm684, %v685, %v683
      %v687 = vmul.f32 %v599, %v599
      %v688 = vmul.f32 %v604, %v604
      %v689 = vmul.f32 %v609, %v609
      %v690 = vmul.f32 %v614, %v614
      %v691 = vmul.f32 %v619, %v619
      %697 = vrot.lane.b32.xlu0 %v687, 64
      %v698 = vpop.permute.xlu0 %697
      %699 = vrot.lane.b32.xlu0 %v688, 64
      %v700 = vpop.permute.xlu0 %699
      %701 = vrot.lane.b32.xlu0 %v689, 64
      %v702 = vpop.permute.xlu0 %701
      %703 = vrot.lane.b32.xlu0 %v690, 64
      %v704 = vpop.permute.xlu0 %703
      %705 = vrot.lane.b32.xlu0 %v691, 64
      %v706 = vpop.permute.xlu0 %705
      %v712 = vadd.f32 %v687, %v698
      %v713 = vadd.f32 %v688, %v700
      %v714 = vadd.f32 %v689, %v702
      %v715 = vadd.f32 %v690, %v704
      %v716 = vadd.f32 %v691, %v706
      %v717 = vrsqrt.pop %v712
      %v718 = vmul.f32 %v712, %v717
      %vm719 = vcmp.eq.f32.partialorder %v712, inf
      %v720 = vsel %vm719, %v712, %v718
      %vm721 = vcmp.eq.f32.partialorder %v712, 0.0
      %v722 = vand.u32 %v712, 2147483648
      %v723 = vsel %vm721, %v722, %v720
      %v724 = vrsqrt.pop %v713
      %v725 = vmul.f32 %v713, %v724
      %vm726 = vcmp.eq.f32.partialorder %v713, inf
      %v727 = vsel %vm726, %v713, %v725
      %vm728 = vcmp.eq.f32.partialorder %v713, 0.0
      %v729 = vand.u32 %v713, 2147483648
      %v730 = vsel %vm728, %v729, %v727
      %v731 = vrsqrt.pop %v714
      %v732 = vmul.f32 %v714, %v731
      %vm733 = vcmp.eq.f32.partialorder %v714, inf
      %v734 = vsel %vm733, %v714, %v732
      %vm735 = vcmp.eq.f32.partialorder %v714, 0.0
      %v736 = vand.u32 %v714, 2147483648
      %v737 = vsel %vm735, %v736, %v734
      %v738 = vrsqrt.pop %v715
      %v739 = vmul.f32 %v715, %v738
      %vm740 = vcmp.eq.f32.partialorder %v715, inf
      %v741 = vsel %vm740, %v715, %v739
      %vm742 = vcmp.eq.f32.partialorder %v715, 0.0
      %v743 = vand.u32 %v715, 2147483648
      %v744 = vsel %vm742, %v743, %v741
      %v745 = vrsqrt.pop %v716
      %v746 = vmul.f32 %v716, %v745
      %vm747 = vcmp.eq.f32.partialorder %v716, inf
      %v748 = vsel %vm747, %v716, %v746
      %vm749 = vcmp.eq.f32.partialorder %v716, 0.0
      %v750 = vand.u32 %v716, 2147483648
      %v751 = vsel %vm749, %v750, %v748
      %v752 = vmax.f32 %v658, 1e-07
      %v753 = vmax.f32 %v665, 1e-07
      %v754 = vmax.f32 %v672, 1e-07
      %v755 = vmax.f32 %v679, 1e-07
      %v756 = vmax.f32 %v686, 1e-07
      %v757 = vlog2.pop %v752
      %v758 = vmul.f32 %v757, 0.6931472
      %v759 = vlog2.pop %v753
      %v760 = vmul.f32 %v759, 0.6931472
      %v761 = vlog2.pop %v754
      %v762 = vmul.f32 %v761, 0.6931472
      %v763 = vlog2.pop %v755
      %v764 = vmul.f32 %v763, 0.6931472
      %v765 = vlog2.pop %v756
      %v766 = vmul.f32 %v765, 0.6931472
      %v767 = vmul.f32 %v758, 0.4342945
      %v768 = vmul.f32 %v760, 0.4342945
      %v769 = vmul.f32 %v762, 0.4342945
      %v770 = vmul.f32 %v764, 0.4342945
      %v771 = vmul.f32 %v766, 0.4342945
      %v772 = vmax.f32 %v723, 1e-07
      %v773 = vmax.f32 %v730, 1e-07
      %v774 = vmax.f32 %v737, 1e-07
      %v775 = vmax.f32 %v744, 1e-07
      %v776 = vmax.f32 %v751, 1e-07
      %v777 = vlog2.pop %v772
      %v778 = vmul.f32 %v777, 0.6931472
      %v779 = vlog2.pop %v773
      %v780 = vmul.f32 %v779, 0.6931472
      %v781 = vlog2.pop %v774
      %v782 = vmul.f32 %v781, 0.6931472
      %v783 = vlog2.pop %v775
      %v784 = vmul.f32 %v783, 0.6931472
      %v785 = vlog2.pop %v776
      %v786 = vmul.f32 %v785, 0.6931472
      %v787 = vmul.f32 %v778, 0.4342945
      %v788 = vmul.f32 %v780, 0.4342945
      %v789 = vmul.f32 %v782, 0.4342945
      %v790 = vmul.f32 %v784, 0.4342945
      %v791 = vmul.f32 %v786, 0.4342945
      %v792 = vsub.f32 %v658, %v723
      %v793 = vsub.f32 %v665, %v730
      %v794 = vsub.f32 %v672, %v737
      %v795 = vsub.f32 %v679, %v744
      %v796 = vsub.f32 %v686, %v751
      %v797 = vadd.f32 %v658, %v723
      %v798 = vadd.f32 %v665, %v730
      %v799 = vadd.f32 %v672, %v737
      %v800 = vadd.f32 %v679, %v744
      %v801 = vadd.f32 %v686, %v751
      %v802 = vld [vmem:[#allocation2] sm:$0x1]
      %v803 = vmul.f32 %v792, %v792
      %v804 = vmul.f32 %v793, %v793
      %v805 = vmul.f32 %v794, %v794
      %v806 = vmul.f32 %v795, %v795
      %v807 = vmul.f32 %v796, %v796
      %vm808 = vcmask 523264
      %v809 = vsel %vm808, %v803, 0.0
      %v810 = vsel %vm808, %v804, 0.0
      %v811 = vadd.f32 %v809, %v810
      %v812 = vsel %vm808, %v805, 0.0
      %v813 = vadd.f32 %v811, %v812
      %v814 = vsel %vm808, %v806, 0.0
      %v815 = vadd.f32 %v813, %v814
      %vm816 = vcmask 520192
      %v817 = vsel %vm816, %v807, 0.0
      %v818 = vadd.f32 %v815, %v817
      %v819 = vrot.slane %v818, 4
      %v820 = vadd.f32 %v818, %v819
      %v821 = vrot.slane %v820, 2
      %v822 = vadd.f32 %v820, %v821
      %v823 = vrot.slane %v822, 1
      %v824 = vadd.f32 %v822, %v823
      %v825 = vadd.f32 %v802, %v824
      %vm826 = vcmask 516096
      %827 = vst.msk [vmem:[#allocation2] sm:$0x1] %vm826, %v825
      %v828 = vld [vmem:[#allocation3] sm:$0x1]
      %v829 = vmul.f32 %v797, %v797
      %v830 = vmul.f32 %v798, %v798
      %v831 = vmul.f32 %v799, %v799
      %v832 = vmul.f32 %v800, %v800
      %v833 = vmul.f32 %v801, %v801
      %v834 = vsel %vm808, %v829, 0.0
      %v835 = vsel %vm808, %v830, 0.0
      %v836 = vadd.f32 %v834, %v835
      %v837 = vsel %vm808, %v831, 0.0
      %v838 = vadd.f32 %v836, %v837
      %v839 = vsel %vm808, %v832, 0.0
      %v840 = vadd.f32 %v838, %v839
      %v841 = vsel %vm816, %v833, 0.0
      %v842 = vadd.f32 %v840, %v841
      %v843 = vrot.slane %v842, 4
      %v844 = vadd.f32 %v842, %v843
      %v845 = vrot.slane %v844, 2
      %v846 = vadd.f32 %v844, %v845
      %v847 = vrot.slane %v846, 1
      %v848 = vadd.f32 %v846, %v847
      %v849 = vadd.f32 %v828, %v848
      %850 = vst.msk [vmem:[#allocation3] sm:$0x1] %vm826, %v849
      %v851 = vld [vmem:[#allocation4] sm:$0x1]
      %v852 = vsub.f32 %v767, %v787
      %v853 = vsub.f32 %v768, %v788
      %v854 = vsub.f32 %v769, %v789
      %v855 = vsub.f32 %v770, %v790
      %v856 = vsub.f32 %v771, %v791
      %v857 = vand.u32 2147483647, %v852
      %v858 = vand.u32 2147483647, %v853
      %v859 = vand.u32 2147483647, %v854
      %v860 = vand.u32 2147483647, %v855
      %v861 = vand.u32 2147483647, %v856
      %v862 = vsel %vm808, %v857, 0.0
      %v863 = vsel %vm808, %v858, 0.0
      %v864 = vadd.f32 %v862, %v863
      %v865 = vsel %vm808, %v859, 0.0
      %v866 = vadd.f32 %v864, %v865
      %v867 = vsel %vm808, %v860, 0.0
      %v868 = vadd.f32 %v866, %v867
      %v869 = vsel %vm816, %v861, 0.0
      %v870 = vadd.f32 %v868, %v869
      %v871 = vrot.slane %v870, 4
      %v872 = vadd.f32 %v870, %v871
      %v873 = vrot.slane %v872, 2
      %v874 = vadd.f32 %v872, %v873
      %v875 = vrot.slane %v874, 1
      %v876 = vadd.f32 %v874, %v875
      %v877 = vadd.f32 %v851, %v876
      %878 = vst.msk [vmem:[#allocation4] sm:$0x1] %vm826, %v877
      // Predicated region
      $region37: #{tpu_custom_call.1} parent=31 // pred_check
        %p879 = pneg %p375
      $region38: #{tpu_custom_call.1} parent=31 // pred_check_branch
        %881 = sbr.rel (%p879) target = $region40
      $region39: #{tpu_custom_call.1} parent=31 // pred_region
        %v882 = vld [vmem:[#allocation2] sm:$0x1]
        %v883 = vsel %vm826, %v882, 0.0
        %884 = vadd.xlane.f32.xlu0 %v883
        %v885 = vpop.xlane.xlu0 %884
        %v886 = vrot.slane %v885, 4
        %v887 = vadd.f32 %v885, %v886
        %v888 = vrot.slane %v887, 2
        %v889 = vadd.f32 %v887, %v888
        %v890 = vrot.slane %v889, 1
        %v891 = vadd.f32 %v889, %v890
        %s892 = vtos %v891
        %v893 = vstv %s892
        %vm894 = vcmask 0
        %895 = vst.msk [vmem:[%s362] sm:$0x1] %vm894, %v893
        %v896 = vld [vmem:[#allocation3] sm:$0x1]
        %v897 = vsel %vm826, %v896, 0.0
        %898 = vadd.xlane.f32.xlu0 %v897
        %v899 = vpop.xlane.xlu0 %898
        %v900 = vrot.slane %v899, 4
        %v901 = vadd.f32 %v899, %v900
        %v902 = vrot.slane %v901, 2
        %v903 = vadd.f32 %v901, %v902
        %v904 = vrot.slane %v903, 1
        %v905 = vadd.f32 %v903, %v904
        %s906 = vtos %v905
        %v907 = vstv %s906
        %908 = vst.msk [vmem:[%s368] sm:$0x1] %vm894, %v907
        %v909 = vld [vmem:[#allocation4] sm:$0x1]
        %v910 = vsel %vm826, %v909, 0.0
        %911 = vadd.xlane.f32.xlu0 %v910
        %v912 = vpop.xlane.xlu0 %911
        %v913 = vrot.slane %v912, 4
        %v914 = vadd.f32 %v912, %v913
        %v915 = vrot.slane %v914, 2
        %v916 = vadd.f32 %v914, %v915
        %v917 = vrot.slane %v916, 1
        %v918 = vadd.f32 %v916, %v917
        %s919 = vtos %v918
        %v920 = vstv %s919
        %921 = vst.msk [vmem:[%s374] sm:$0x1] %vm894, %v920
      $region40: #{tpu_custom_call.1} parent=31 // pred_fallthru
        _
      %p922 = scmp.lt.s32.totalorder %s22, 1
      %s923 = scalar_select %p922, %s22, 1
      %p924 = scmp.lt.s32.totalorder %s23, 0
      %s925 = scalar_select %p924, %s23, 0
      %s926 = sadd.s32 %s925, %s923
      %s927 = scalar_lea.vmem %s3, %s926
      %p928 = scmp.lt.s32.totalorder %s22, 1
      %s929 = scalar_select %p928, %s22, 1
      %p930 = scmp.lt.s32.totalorder %s23, 0
      %s931 = scalar_select %p930, %s23, 0
      %s932 = sadd.s32 %s931, %s929
      %s933 = scalar_lea.vmem %s4, %s932
      %p934 = scmp.lt.s32.totalorder %s22, 1
      %s935 = scalar_select %p934, %s22, 1
      %p936 = scmp.lt.s32.totalorder %s23, 0
      %s937 = scalar_select %p936, %s23, 0
      %s938 = sadd.s32 %s937, %s935
      %s939 = scalar_lea.vmem %s5, %s938
      // Predicated region
      $region41: #{tpu_custom_call.1} parent=31 // pred_check
        %p940 = pneg %p145
      $region42: #{tpu_custom_call.1} parent=31 // pred_check_branch
        %942 = sbr.rel (%p940) target = $region44
      $region43: #{tpu_custom_call.1} parent=31 // pred_region
        _
      $region44: #{tpu_custom_call.1} parent=31 // pred_fallthru
        _
      // Predicated region
      $region45: #{tpu_custom_call.1} parent=31 // pred_check
        %p943 = pneg %p173
      $region46: #{tpu_custom_call.1} parent=31 // pred_check_branch
        %945 = sbr.rel (%p943) target = $region48
      $region47: #{tpu_custom_call.1} parent=31 // pred_region
        _
      $region48: #{tpu_custom_call.1} parent=31 // pred_fallthru
        _
      // Predicated region
      $region49: #{tpu_custom_call.1} parent=31 // pred_check
        %p946 = pneg %p201
      $region50: #{tpu_custom_call.1} parent=31 // pred_check_branch
        %948 = sbr.rel (%p946) target = $region52
      $region51: #{tpu_custom_call.1} parent=31 // pred_region
        _
      $region52: #{tpu_custom_call.1} parent=31 // pred_fallthru
        _
    $region32: #{tpu_custom_call.1} parent=5 // pred_fallthru
      _
    %p949 = scmp.le.s32.totalorder 2, %s12
    // Predicated region
    $region53: #{tpu_custom_call.1} parent=5 // pred_check
      %p950 = pneg %p949
    $region54: #{tpu_custom_call.1} parent=5 // pred_check_branch
      %952 = sbr.rel (%p950) target = $region56
    $region55: #{tpu_custom_call.1} parent=5 // pred_region
      %s953 = ssub.s32 %s12, 2
      // Predicated region
      $region57: #{tpu_custom_call.1} parent=55 // pred_check
        %p954 = pneg %p151
      $region58: #{tpu_custom_call.1} parent=55 // pred_check_branch
        %956 = sbr.rel (%p954) target = $region60
      $region59: #{tpu_custom_call.1} parent=55 // pred_region
        %p957 = scmp.lt.s32.totalorder %s25, 1
        %s958 = scalar_select %p957, %s25, 1
        %p959 = scmp.lt.s32.totalorder %s26, 0
        %s960 = scalar_select %p959, %s26, 0
        %s961 = sadd.s32 %s960, %s958
        %s962 = scalar_lea.vmem %s3, %s961
      $region60: #{tpu_custom_call.1} parent=55 // pred_fallthru
        _
      // Predicated region
      $region61: #{tpu_custom_call.1} parent=55 // pred_check
        %p963 = pneg %p179
      $region62: #{tpu_custom_call.1} parent=55 // pred_check_branch
        %965 = sbr.rel (%p963) target = $region64
      $region63: #{tpu_custom_call.1} parent=55 // pred_region
        %p966 = scmp.lt.s32.totalorder %s25, 1
        %s967 = scalar_select %p966, %s25, 1
        %p968 = scmp.lt.s32.totalorder %s26, 0
        %s969 = scalar_select %p968, %s26, 0
        %s970 = sadd.s32 %s969, %s967
        %s971 = scalar_lea.vmem %s4, %s970
      $region64: #{tpu_custom_call.1} parent=55 // pred_fallthru
        _
      // Predicated region
      $region65: #{tpu_custom_call.1} parent=55 // pred_check
        %p972 = pneg %p207
      $region66: #{tpu_custom_call.1} parent=55 // pred_check_branch
        %974 = sbr.rel (%p972) target = $region68
      $region67: #{tpu_custom_call.1} parent=55 // pred_region
        %p975 = scmp.lt.s32.totalorder %s25, 1
        %s976 = scalar_select %p975, %s25, 1
        %p977 = scmp.lt.s32.totalorder %s26, 0
        %s978 = scalar_select %p977, %s26, 0
        %s979 = sadd.s32 %s978, %s976
        %s980 = scalar_lea.vmem %s5, %s979
      $region68: #{tpu_custom_call.1} parent=55 // pred_fallthru
        _
    $region56: #{tpu_custom_call.1} parent=5 // pred_fallthru
      _
  $region6: #{tpu_custom_call.1} parent=0 // loop_footer
    %s16 = sadd.s32 1, %s12
  $region7: #{tpu_custom_call.1} parent=0 // loop_footer_branch
    %11 = sbr.rel target = $region3
  $region8: #{tpu_custom_call.1} parent=0 // loop_exit
    _

</llo_original>
